<compile_context>
chip_gen: v5e
topology: v5e:2x2
jax: 0.10.0
libtpu: 0.0.40
codegen_flags: <defaults>
</compile_context>

<pallas_src>
import functools

import jax
import jax.numpy as jnp
from jax.experimental import pallas as pl
from jax.experimental.pallas import tpu as pltpu


def _round_up(x, m):
    return (x + m - 1) // m * m


def _device_kind():
    try:
        return jax.devices()[0].device_kind.lower()
    except Exception:
        return ""


def _vmem_capacity_bytes():
    try:
        return int(pltpu.get_tpu_info().vmem_capacity_bytes)
    except Exception:
        kind = _device_kind()
        if "v5 lite" in kind or "v5e" in kind or "v5lite" in kind or "v6" in kind:
            return 128 << 20
        return 64 << 20  # conservative (v7x)


def _default_block_i():
    kind = _device_kind()
    if "v5 lite" in kind or "v5e" in kind or "v5lite" in kind:
        return 1024  # ample 128 MiB VMEM; fewer grid steps / acc RMWs
    return 512


def _default_block_m():
    kind = _device_kind()
    if "v5 lite" in kind or "v5e" in kind or "v5lite" in kind:
        return 256   # roofline crossover ~240 FLOP/B, 128-granular MXU
    if "v6" in kind:
        return 1024  # crossover ~650 FLOP/B; 128 MiB VMEM has room
    return 512       # v7x: crossover ~310 FLOP/B within 64 MiB VMEM; safe default


def _vmem_needed(tm, ti, H, act_bytes, w_bytes, out_bytes, need_acc):
    return (
        2 * tm * H * act_bytes        # x tile (double-buffered)
        + 2 * H * ti * w_bytes        # fused (gate+up) weight tile
        + 2 * ti * H * w_bytes        # down-projection weight tile
        + 2 * tm * H * out_bytes      # output tile
        + (tm * H * 4 if need_acc else 0)   # f32 accumulator scratch
        + tm * ti * 8                 # Mosaic internal scratch: f32 h + matmul result
    )


def _llama_mlp_kernel(x_ref, wgu_ref, wd_ref, o_ref, *scratch):
    """One (M-tile, I-tile) grid step.

    x_ref:   [tm, H]        token tile (constant along the I axis)
    wgu_ref: [1, H, ti]     folded (gate+up) weight tile (block-major, contiguous)
    wd_ref:  [ti, H]        down-projection weight tile
    o_ref:   [tm, H]        output tile (resident across the I axis)
    scratch: ([tm, H] f32,) accumulator -- only present when o_ref is not f32
    """
    acc_ref = scratch[0] if scratch else o_ref
    j = pl.program_id(1)

    @pl.when(j == 0)
    def _init():
        acc_ref[...] = jnp.zeros_like(acc_ref)

    x = x_ref[...]
    # Single matmul produces gate(x)+up(x) for this I tile (exact fold).
    h = jnp.dot(x, wgu_ref[0], preferred_element_type=jnp.float32)  # [tm, ti]
    h = h * jax.nn.sigmoid(h)  # SiLU in f32 (EUP exp + VPU mul)

    # Partial down-projection; summing over the I tiles completes the contraction.
    acc_ref[...] += jnp.dot(
        h.astype(wd_ref.dtype), wd_ref[...], preferred_element_type=jnp.float32
    )

    if scratch:
        @pl.when(j == pl.num_programs(1) - 1)
        def _finalize():
            o_ref[...] = acc_ref[...].astype(o_ref.dtype)


def prepare_llama_mlp_weights(w_gate, w_up, w_down, *, block_i=None):
    """One-time weight preparation (call at parameter-load time, NOT per step).

    Args:
      w_gate, w_up: [I, H]  nn.Linear weights (out, in) for gate_proj / up_proj
      w_down:       [H, I]  nn.Linear weight for down_proj
      block_i:              I-tile size (default: chip-aware). The I tile size is
                            baked into the returned layout; llama_mlp reads it back.
    Returns:
      wgu_blocked: [I//ti, H, ti]  folded (gate+up) weight, block-major so every
                                   grid step's weight DMA is one contiguous slab
      wd_t:        [I, H]          transposed down_proj weight ((ti,H) tiles are
                                   already contiguous in this layout)
    """
    I, H = w_gate.shape
    if block_i is None:
        block_i = _default_block_i()
    ti = min(block_i, I)
    assert I % ti == 0, "intermediate_size must be divisible by block_i"
    n_i = I // ti

    # Exact algebraic fold (bias-free linears, sum BEFORE the activation):
    #   x @ Wg^T + x @ Wu^T == x @ (Wg + Wu)^T
    w_gu = (w_gate.astype(jnp.float32) + w_up.astype(jnp.float32)).T  # [H, I] f32
    w_gu = w_gu.astype(w_gate.dtype)
    wgu_blocked = w_gu.reshape(H, n_i, ti).transpose(1, 0, 2)  # [n_i, H, ti]

    wd_t = w_down.T  # [I, H]
    return wgu_blocked, wd_t


@functools.partial(jax.jit, static_argnames=("block_m",))
def _llama_mlp_impl(x, wgu_blocked, wd_t, *, block_m):
    B, S, H = x.shape
    n_i, Hw, ti = wgu_blocked.shape
    I = n_i * ti
    assert Hw == H and wd_t.shape == (I, H), "weight shapes inconsistent with x"
    assert block_m % 8 == 0, "block_m must be a multiple of 8"

    act_bytes = jnp.dtype(x.dtype).itemsize
    w_bytes = jnp.dtype(wgu_blocked.dtype).itemsize
    out_dtype = x.dtype
    out_bytes = act_bytes
    need_acc = jnp.dtype(out_dtype) != jnp.float32

    # --- chip-aware VMEM budget: shrink block_m until the working set fits ---
    vmem_cap = _vmem_capacity_bytes()
    budget = vmem_cap - (8 << 20)  # headroom for control structures / pipelining
    while block_m > 128 and _vmem_needed(
        block_m, ti, H, act_bytes, w_bytes, out_bytes, need_acc
    ) > budget:
        block_m //= 2

    # --- balanced M tiling (avoid wasting most of the last tile on padding) ---
    M = B * S
    Mp8 = _round_up(M, 8)
    n_m = pl.cdiv(Mp8, block_m)
    tm = min(block_m, _round_up(-(-Mp8 // n_m), 8))
    Mp = n_m * tm

    x2d = x.reshape(M, H)
    if Mp != M:
        x2d = jnp.pad(x2d, ((0, Mp - M), (0, 0)))  # zero rows -> zero outputs

    vmem_needed = _vmem_needed(tm, ti, H, act_bytes, w_bytes, out_bytes, need_acc)
    vmem_limit = int(min(max(vmem_needed + (4 << 20), 32 << 20), vmem_cap - (2 << 20)))

    cost = pl.CostEstimate(
        flops=4 * M * H * I,            # 2 matmuls (after fold), 2 flops per MAC
        transcendentals=M * I,          # one exp per intermediate element
        # weights are re-streamed from HBM once per M tile
        bytes_accessed=2 * M * H * act_bytes + n_m * 2 * H * I * w_bytes,
    )

    scratch_shapes = [pltpu.VMEM((tm, H), jnp.float32)] if need_acc else []

    out2d = pl.pallas_call(
        _llama_mlp_kernel,
        out_shape=jax.ShapeDtypeStruct((Mp, H), out_dtype),
        grid_spec=pltpu.PrefetchScalarGridSpec(
            num_scalar_prefetch=0,
            grid=(n_m, n_i),
            in_specs=[
                pl.BlockSpec((tm, H), lambda i, j: (i, 0)),         # x tile
                pl.BlockSpec((1, H, ti), lambda i, j: (j, 0, 0)),   # folded gate+up (contiguous)
                pl.BlockSpec((ti, H), lambda i, j: (j, 0)),         # down weight (contiguous)
            ],
            out_specs=pl.BlockSpec((tm, H), lambda i, j: (i, 0)),   # resident over j
            scratch_shapes=scratch_shapes,
        ),
        compiler_params=pltpu.CompilerParams(
            dimension_semantics=("parallel", "arbitrary"),
            vmem_limit_bytes=vmem_limit,
        ),
        cost_estimate=cost,
    )(x2d, wgu_blocked, wd_t)

    if Mp != M:
        out2d = out2d[:M]
    return out2d.reshape(B, S, H)


def llama_mlp(x, wgu_blocked, wd_t, *, block_m=None):
    """
    Args:
      x:            [B, S, H]      activations (f32 or bf16)
      wgu_blocked:  [I//ti, H, ti] folded weight from prepare_llama_mlp_weights
      wd_t:         [I, H]         transposed down_proj weight
      block_m:      M-tile upper bound (default: chip-aware)
    Returns:
      [B, S, H]
    """
    if block_m is None:
        block_m = _default_block_m()
    return _llama_mlp_impl(x, wgu_blocked, wd_t, block_m=int(block_m))


def _reference(x, w_gate, w_up, w_down):
    # Matches the PyTorch module: down_proj(SiLU(gate_proj(x) + up_proj(x)))
    xf = x.astype(jnp.float32)
    g = jnp.einsum("bsh,ih->bsi", xf, w_gate.astype(jnp.float32))
    u = jnp.einsum("bsh,ih->bsi", xf, w_up.astype(jnp.float32))
    h = g + u
    h = h * jax.nn.sigmoid(h)
    return jnp.einsum("bsi,hi->bsh", h, w_down.astype(jnp.float32))


if __name__ == "__main__":
    # --- Test 1: small f32 shapes consistent with the module [batch, seq, hidden] ---
    batch, seq, hidden, intermediate = 2, 8, 32, 64

    key = jax.random.PRNGKey(0)
    kx, kg, ku, kd = jax.random.split(key, 4)

    x = jax.random.normal(kx, (batch, seq, hidden), dtype=jnp.float32)
    # nn.Linear weights, shape [out_features, in_features], bias=False
    w_gate = jax.random.normal(kg, (intermediate, hidden), dtype=jnp.float32) * 0.05
    w_up = jax.random.normal(ku, (intermediate, hidden), dtype=jnp.float32) * 0.05
    w_down = jax.random.normal(kd, (hidden, intermediate), dtype=jnp.float32) * 0.05

    wgu, wd_t = prepare_llama_mlp_weights(w_gate, w_up, w_down, block_i=512)
    out = jax.block_until_ready(llama_mlp(x, wgu, wd_t))
    ref = _reference(x, w_gate, w_up, w_down)
    assert out.shape == (batch, seq, hidden)
    assert jnp.allclose(out, ref, atol=1e-4, rtol=1e-4), "mismatch vs reference (small f32)"

    # --- Test 2: multi-tile grid (multiple M tiles AND I tiles), f32 accumulator path ---
    b2, s2, h2, i2 = 2, 128, 256, 512
    kx2, kg2, ku2, kd2 = jax.random.split(jax.random.PRNGKey(1), 4)
    x2 = jax.random.normal(kx2, (b2, s2, h2), dtype=jnp.float32)
    wg2 = jax.random.normal(kg2, (i2, h2), dtype=jnp.float32) * 0.03
    wu2 = jax.random.normal(ku2, (i2, h2), dtype=jnp.float32) * 0.03
    wd2 = jax.random.normal(kd2, (h2, i2), dtype=jnp.float32) * 0.03

    wgu2, wd_t2 = prepare_llama_mlp_weights(wg2, wu2, wd2, block_i=128)
    out2 = jax.block_until_ready(llama_mlp(x2, wgu2, wd_t2, block_m=64))
    ref2 = _reference(x2, wg2, wu2, wd2)
    assert out2.shape == (b2, s2, h2)
    assert jnp.allclose(out2, ref2, atol=2e-3, rtol=2e-3), "mismatch vs reference (tiled f32)"

    # --- Test 3: bf16, H >= 1024, ragged M (multiple balanced M tiles), scratch-acc path ---
    b3, s3, h3, i3 = 2, 160, 1024, 2048
    kx3, kg3, ku3, kd3 = jax.random.split(jax.random.PRNGKey(2), 4)
    x3 = jax.random.normal(kx3, (b3, s3, h3), dtype=jnp.bfloat16)
    wg3 = (jax.random.normal(kg3, (i3, h3), dtype=jnp.float32) * 0.02).astype(jnp.bfloat16)
    wu3 = (jax.random.normal(ku3, (i3, h3), dtype=jnp.float32) * 0.02).astype(jnp.bfloat16)
    wd3 = (jax.random.normal(kd3, (h3, i3), dtype=jnp.float32) * 0.02).astype(jnp.bfloat16)

    wgu3, wd_t3 = prepare_llama_mlp_weights(wg3, wu3, wd3, block_i=512)
    out3 = jax.block_until_ready(llama_mlp(x3, wgu3, wd_t3, block_m=128))
    ref3 = _reference(x3, wg3, wu3, wd3)
    assert out3.shape == (b3, s3, h3)
    err = jnp.max(jnp.abs(out3.astype(jnp.float32) - ref3))
    assert err < 2e-2, f"mismatch vs reference (bf16): max abs err {err}"

    print("KERNEL_OK")
</pallas_src>

<mosaic_0001>
module attributes {stable_mosaic.version = 11 : i64} {
  func.func @_llama_mlp_kernel(%arg0: i32, %arg1: i32, %arg2: memref<16x32xf32, #tpu.memory_space<vmem>>, %arg3: memref<1x32x64xf32, #tpu.memory_space<vmem>>, %arg4: memref<64x32xf32, #tpu.memory_space<vmem>>, %arg5: memref<16x32xf32, #tpu.memory_space<vmem>>) attributes {dimension_semantics = [#tpu.dimension_semantics<parallel>, #tpu.dimension_semantics<arbitrary>], iteration_bounds = array<i64: 1, 1>, scalar_prefetch = 0 : i64, scratch_operands = 0 : i64, tpu.core_type = #tpu.core_type<tc>, window_params = [{transform_indices = @transform_0, window_bounds = array<i64: 16, 32>}, {transform_indices = @transform_1, window_bounds = array<i64: 1, 32, 64>}, {transform_indices = @transform_2, window_bounds = array<i64: 64, 32>}, {transform_indices = @transform_3, window_bounds = array<i64: 16, 32>}]} {
    %c0_i32 = arith.constant 0 : i32
    %0 = arith.cmpi eq, %arg1, %c0_i32 : i32
    %1 = arith.extui %0 : i1 to i32
    %c0_i32_0 = arith.constant 0 : i32
    %2 = arith.cmpi ne, %1, %c0_i32_0 : i32
    scf.if %2 {
      %cst_13 = arith.constant 0.000000e+00 : f32
      %18 = vector.broadcast %cst_13 : f32 to vector<16x32xf32>
      %c0_14 = arith.constant 0 : index
      %c0_15 = arith.constant 0 : index
      %19 = vector.load %arg5[%c0_14, %c0_15] : memref<16x32xf32, #tpu.memory_space<vmem>>, vector<16x32xf32>
      tpu.vector_store %arg5[%c0_14, %c0_15], %18 {strides = array<i32>} : memref<16x32xf32, #tpu.memory_space<vmem>>, vector<16x32xf32>,
    } else {
    }
    %c0 = arith.constant 0 : index
    %c0_1 = arith.constant 0 : index
    %3 = vector.load %arg2[%c0, %c0_1] : memref<16x32xf32, #tpu.memory_space<vmem>>, vector<16x32xf32>
    %c0_2 = arith.constant 0 : index
    %c0_3 = arith.constant 0 : index
    %c0_4 = arith.constant 0 : index
    %4 = vector.load %arg3[%c0_2, %c0_3, %c0_4] : memref<1x32x64xf32, #tpu.memory_space<vmem>>, vector<1x32x64xf32>
    %5 = vector.shape_cast %4 : vector<1x32x64xf32> to vector<32x64xf32>
    %cst = arith.constant dense<0.000000e+00> : vector<16x64xf32>
    %6 = tpu.matmul %3, %5, %cst {dimension_numbers = #tpu.dot_dimension_numbers<[1], [0], [0], [1], [0, 0, 1, 1], [], []>} : vector<16x32xf32>, vector<32x64xf32>, vector<16x64xf32> -> vector<16x64xf32>
    %7 = arith.negf %6 : vector<16x64xf32>
    %8 = math.exp %7 : vector<16x64xf32>
    %cst_5 = arith.constant 1.000000e+00 : f32
    %9 = vector.broadcast %cst_5 : f32 to vector<16x64xf32>
    %10 = arith.addf %9, %8 : vector<16x64xf32>
    %11 = arith.divf %9, %10 : vector<16x64xf32>
    %12 = arith.mulf %6, %11 : vector<16x64xf32>
    %c0_6 = arith.constant 0 : index
    %c0_7 = arith.constant 0 : index
    %13 = vector.load %arg5[%c0_6, %c0_7] : memref<16x32xf32, #tpu.memory_space<vmem>>, vector<16x32xf32>
    %c0_8 = arith.constant 0 : index
    %c0_9 = arith.constant 0 : index
    %14 = vector.load %arg4[%c0_8, %c0_9] : memref<64x32xf32, #tpu.memory_space<vmem>>, vector<64x32xf32>
    %cst_10 = arith.constant dense<0.000000e+00> : vector<16x32xf32>
    %15 = tpu.matmul %12, %14, %cst_10 {dimension_numbers = #tpu.dot_dimension_numbers<[1], [0], [0], [1], [0, 0, 1, 1], [], []>} : vector<16x64xf32>, vector<64x32xf32>, vector<16x32xf32> -> vector<16x32xf32>
    %16 = arith.addf %13, %15 : vector<16x32xf32>
    %c0_11 = arith.constant 0 : index
    %c0_12 = arith.constant 0 : index
    %17 = vector.load %arg5[%c0_11, %c0_12] : memref<16x32xf32, #tpu.memory_space<vmem>>, vector<16x32xf32>
    tpu.vector_store %arg5[%c0_11, %c0_12], %16 {strides = array<i32>} : memref<16x32xf32, #tpu.memory_space<vmem>>, vector<16x32xf32>,
    return
  }
  func.func @transform_0(%arg0: i32, %arg1: i32) -> (i32, i32) {
    %c0_i32 = arith.constant 0 : i32
    %c0_i32_0 = arith.constant 0 : i32
    return %arg0, %c0_i32 : i32, i32
  }
  func.func @transform_1(%arg0: i32, %arg1: i32) -> (i32, i32, i32) {
    %c0_i32 = arith.constant 0 : i32
    %c0_i32_0 = arith.constant 0 : i32
    %c0_i32_1 = arith.constant 0 : i32
    return %arg1, %c0_i32, %c0_i32_0 : i32, i32, i32
  }
  func.func @transform_2(%arg0: i32, %arg1: i32) -> (i32, i32) {
    %c0_i32 = arith.constant 0 : i32
    %c0_i32_0 = arith.constant 0 : i32
    return %arg1, %c0_i32 : i32, i32
  }
  func.func @transform_3(%arg0: i32, %arg1: i32) -> (i32, i32) {
    %c0_i32 = arith.constant 0 : i32
    %c0_i32_0 = arith.constant 0 : i32
    return %arg0, %c0_i32 : i32, i32
  }
}

</mosaic_0001>

<llo_original>
// kernel: _llama_mlp_impl.1
$region0: #{_llama_mlp_impl.1}
  #allocation0 [shape = 'u32[]', space=smem, size = 0x4, offset = 0x4, fixed_abs, tag = 'smem constant byte address 0x4 - core index']
  #allocation1 [shape = 'u32[72,128]{1,0:T(1,128)}', space=vmem, size = 0x9000, scoped, tag = 'internal scratch']
  %s0 = inlined_call_operand.vmem [shape: f32[16,32], index: 0, kind: input, shape index: {}]
  %s1 = inlined_call_operand.vmem [shape: f32[1,32,64], index: 1, kind: input, shape index: {}]
  %s2 = inlined_call_operand.vmem [shape: f32[64,32], index: 2, kind: input, shape index: {}]
  %s3 = inlined_call_operand.hbm [shape: f32[16,32], index: 3, kind: output, shape index: {}]
  %s4 = sld [smem:[#allocation0]]
  $region26: #{_llama_mlp_impl.1} parent=0
    _
  %s6 = ssub.s32 1, %s4
  %s7 = scalar_select 0, %s6, %s4
  $region1: #{_llama_mlp_impl.1} parent=0
    #allocation2 [shape = 'u8[8192]{0}', space=vmem, size = 0x2000, scoped, tag = 'output window, operand 0, single buffered']
    #allocation3 [shape = 's32[1]{0}', space=sflag, size = 0x4, scoped, tag = 'scoped memory for _llama_mlp_impl.1']
    %8 = vsyncpa [#allocation3], 0
    // Predicated region
    $region2: #{_llama_mlp_impl.1} parent=1 // pred_check
      _
    $region3: #{_llama_mlp_impl.1} parent=1 // pred_check_branch
      %10 = sbr.rel (0) target = $region5
    $region4: #{_llama_mlp_impl.1} parent=1 // pred_region
      _
    $region5: #{_llama_mlp_impl.1} parent=1 // pred_fallthru
      _
    // Predicated region
    $region6: #{_llama_mlp_impl.1} parent=1 // pred_check
      _
    $region7: #{_llama_mlp_impl.1} parent=1 // pred_check_branch
      %12 = sbr.rel (0) target = $region9
    $region8: #{_llama_mlp_impl.1} parent=1 // pred_region
      _
    $region9: #{_llama_mlp_impl.1} parent=1 // pred_fallthru
      _
    // Predicated region
    $region10: #{_llama_mlp_impl.1} parent=1 // pred_check
      _
    $region11: #{_llama_mlp_impl.1} parent=1 // pred_check_branch
      %14 = sbr.rel (0) target = $region13
    $region12: #{_llama_mlp_impl.1} parent=1 // pred_region
      _
    $region13: #{_llama_mlp_impl.1} parent=1 // pred_fallthru
      _
    %p15 = scmp.eq.s32.totalorder 0, 0
    // Predicated region
    $region14: #{_llama_mlp_impl.1} parent=1 // pred_check
      %p16 = pneg %p15
    $region15: #{_llama_mlp_impl.1} parent=1 // pred_check_branch
      %18 = sbr.rel (%p16) target = $region17
    $region16: #{_llama_mlp_impl.1} parent=1 // pred_region
      %vm19 = vcmask 261120
      %20 = vst.msk [vmem:[#allocation2] sm:$0xff] %vm19, 0.0
      %21 = vst.msk [vmem:[#allocation2 + $0x8] sm:$0xff] %vm19, 0.0
    $region17: #{_llama_mlp_impl.1} parent=1 // pred_fallthru
      _
    %v22 = vld [vmem:[%s0] sm:$0xff]
    %v23 = vld [vmem:[%s0 + $0x8] sm:$0xff]
    %v24 = vld [vmem:[%s1] sm:$0xff]
    %v25 = vld [vmem:[%s1 + $0x8] sm:$0xff]
    %v26 = vld [vmem:[%s1 + $0x10] sm:$0xff]
    %v27 = vld [vmem:[%s1 + $0x18] sm:$0xff]
    %vm28 = vcmask 261120
    %v30 = vsel %vm28, %v22, 0
    %v33 = vsel %vm28, %v23, 0
    %35 = vmatpush.msra.mxu0 0.0
    %36 = vmatpush.msra.mxu0 0.0
    %37 = vmatpush.msra.mxu0 0.0
    %38 = vmatpush.msra.mxu0 0.0
    %39 = vmatpush.msra.mxu0 0.0
    %40 = vmatpush.msra.mxu0 0.0
    %41 = vmatpush.msra.mxu0 0.0
    %42 = vmatpush.msra.mxu0 0.0
    %43 = vmatpush.msra.mxu0 0.0
    %44 = vmatpush.msra.mxu0 0.0
    %45 = vmatpush.msra.mxu0 0.0
    %46 = vmatpush.msra.mxu0 0.0
    %47 = vmatpush.msra.mxu0 %v27
    %48 = vmatpush.msra.mxu0 %v26
    %49 = vmatpush.msra.mxu0 %v25
    %50 = vmatpush.msra.mxu0 %v24
    %51 = vmatmul.f32.gmra.mxu0 %v30
    %v52 = vpop.f32.mrf.mxu0
    %v53 = vadd.f32 0.0, %v52
    %54 = vmatmul.f32.gmra.mxu0 %v33
    %v55 = vpop.f32.mrf.mxu0
    %v56 = vadd.f32 0.0, %v55
    %57 = vdwg.mxu0
    %v58 = vxor.u32 %v53, 2147483648
    %v59 = vxor.u32 %v56, 2147483648
    %v60 = vmul.f32 %v58, 1.442695
    %v61 = vpow.pop %v60
    %v62 = vmul.f32 %v59, 1.442695
    %v63 = vpow.pop %v62
    %v64 = vadd.f32 %v61, 1.0
    %v65 = vadd.f32 %v63, 1.0
    %v66 = vrcp.pop %v64
    %v67 = vmul.f32 %v64, %v66
    %v68 = vsub.f32 1.0, %v67
    %v69 = vmul.f32 %v66, %v68
    %v70 = vadd.f32 %v66, %v69
    %vm71 = vweird.f32 %v64
    %vm72 = vweird.f32 %v66
    %vm73 = vmor %vm71, %vm72
    %v74 = vsel %vm73, %v66, %v70
    %v75 = vand.u32 2147483647, %v64
    %vm76 = vcmp.eq.f32.partialorder %v75, 8.507059e+37
    %v77 = vand.u32 %v64, 2147483648
    %v78 = vor.u32 1.1754944e-38, %v77
    %v79 = vsel %vm76, %v78, %v74
    %v80 = vmul.f32 1.0, %v79
    %v81 = vrcp.pop %v65
    %v82 = vmul.f32 %v65, %v81
    %v83 = vsub.f32 1.0, %v82
    %v84 = vmul.f32 %v81, %v83
    %v85 = vadd.f32 %v81, %v84
    %vm86 = vweird.f32 %v65
    %vm87 = vweird.f32 %v81
    %vm88 = vmor %vm86, %vm87
    %v89 = vsel %vm88, %v81, %v85
    %v90 = vand.u32 2147483647, %v65
    %vm91 = vcmp.eq.f32.partialorder %v90, 8.507059e+37
    %v92 = vand.u32 %v65, 2147483648
    %v93 = vor.u32 1.1754944e-38, %v92
    %v94 = vsel %vm91, %v93, %v89
    %v95 = vmul.f32 1.0, %v94
    %v96 = vmul.f32 %v53, %v80
    %v97 = vmul.f32 %v56, %v95
    %v98 = vld [vmem:[#allocation2] sm:$0xff]
    %v99 = vld [vmem:[#allocation2 + $0x8] sm:$0xff]
    %v100 = vld [vmem:[%s2] sm:$0xff]
    %v101 = vld [vmem:[%s2 + $0x8] sm:$0xff]
    %v102 = vld [vmem:[%s2 + $0x10] sm:$0xff]
    %v103 = vld [vmem:[%s2 + $0x18] sm:$0xff]
    %v104 = vld [vmem:[%s2 + $0x20] sm:$0xff]
    %v105 = vld [vmem:[%s2 + $0x28] sm:$0xff]
    %v106 = vld [vmem:[%s2 + $0x30] sm:$0xff]
    %v107 = vld [vmem:[%s2 + $0x38] sm:$0xff]
    %vm108 = vcmask 523264
    %v110 = vsel %vm108, %v96, 0
    %v113 = vsel %vm108, %v97, 0
    %115 = vmatpush.msra.mxu0 0.0
    %116 = vmatpush.msra.mxu0 0.0
    %117 = vmatpush.msra.mxu0 0.0
    %118 = vmatpush.msra.mxu0 0.0
    %119 = vmatpush.msra.mxu0 0.0
    %120 = vmatpush.msra.mxu0 0.0
    %121 = vmatpush.msra.mxu0 0.0
    %122 = vmatpush.msra.mxu0 0.0
    %123 = vmatpush.msra.mxu0 %v107
    %124 = vmatpush.msra.mxu0 %v106
    %125 = vmatpush.msra.mxu0 %v105
    %126 = vmatpush.msra.mxu0 %v104
    %127 = vmatpush.msra.mxu0 %v103
    %128 = vmatpush.msra.mxu0 %v102
    %129 = vmatpush.msra.mxu0 %v101
    %130 = vmatpush.msra.mxu0 %v100
    %131 = vmatmul.f32.gmra.mxu0 %v110
    %v132 = vpop.f32.mrf.mxu0
    %v133 = vadd.f32 0.0, %v132
    %134 = vmatmul.f32.gmra.mxu0 %v113
    %v135 = vpop.f32.mrf.mxu0
    %v136 = vadd.f32 0.0, %v135
    %137 = vdwg.mxu0
    %v138 = vadd.f32 %v98, %v133
    %v139 = vadd.f32 %v99, %v136
    %140 = vst.msk [vmem:[#allocation2] sm:$0xff] %vm28, %v138
    %141 = vst.msk [vmem:[#allocation2 + $0x8] sm:$0xff] %vm28, %v139
    // Predicated region
    $region18: #{_llama_mlp_impl.1} parent=1 // pred_check
      _
    $region19: #{_llama_mlp_impl.1} parent=1 // pred_check_branch
      %143 = sbr.rel (0) target = $region21
    $region20: #{_llama_mlp_impl.1} parent=1 // pred_region
      %145 = vsyncadd [#allocation3], 0
      %s146 = sshll.u32 [#allocation2], 4
      %s147 = int_to_ptr.vmem [resolvable:$true] %s146
      %s148 = sshll.u32 %s3, 4
      %s149 = int_to_ptr.hbm [resolvable:$true] %s148
      %154 = dma.vmem_to_hbm [thread:$0]  %s147, 256, %s149, [#allocation3], 128, 128, 8
    $region21: #{_llama_mlp_impl.1} parent=1 // pred_fallthru
      _
    // Predicated region
    $region22: #{_llama_mlp_impl.1} parent=1 // pred_check
      _
    $region23: #{_llama_mlp_impl.1} parent=1 // pred_check_branch
      %156 = sbr.rel (0) target = $region25
    $region24: #{_llama_mlp_impl.1} parent=1 // pred_region
      %158 = dma.done [#allocation3], 256
    $region25: #{_llama_mlp_impl.1} parent=1 // pred_fallthru
      _
    %159 = vsyncpa [#allocation3], 1

</llo_original>
